<compile_context>
chip_gen: v6e
topology: v6e:2x2x1
jax: 0.10.0
libtpu: 0.0.40
codegen_flags: <defaults>
</compile_context>

<pallas_src>
import functools
import math

import jax
import jax.numpy as jnp
from jax import lax
from jax.experimental import pallas as pl
from jax.experimental.pallas import tpu as pltpu

# ~1 MiB f32 per input tile; with the output tile and double buffering that is
# ~4-5 MiB of VMEM -> safely under v7x's 64 MiB (and v5e/v6e's 128 MiB).
_TARGET_TILE_ELEMS = 2048 * 128


def _i32(v: int):
    """A uint32 literal expressed as its two's-complement int32 value."""
    v &= 0xFFFFFFFF
    return jnp.int32(v - (1 << 32) if v >= (1 << 31) else v)


def _gbd_kernel(seed_ref, thresh_ref, inv_ref, x_ref, o_ref, *, lane: int, block_rows: int):
    """One (block_rows, lane) tile of gradient-based dropout.

    thresh_ref : (1, lane) int32  -- keep_prob * 2^32 with the sign bit flipped,
                 so a signed '<' implements the unsigned compare.
    inv_ref    : (1, lane) float32 -- 1 / keep_prob (inverted-dropout scale).
    """
    shape = x_ref.shape
    seed = seed_ref[0]                              # int32 scalar (SMEM prefetch)
    base = pl.program_id(0) * block_rows            # first global row of this tile

    # Unique global element index (int32; wraparound only matters > 2^31 elems).
    rows = lax.broadcasted_iota(jnp.int32, shape, 0) + base
    cols = lax.broadcasted_iota(jnp.int32, shape, 1)
    idx = rows * lane + cols

    # Counter-based RNG: murmur3 fmix32 of (idx, seed).  All int32 VPU ops;
    # logical right shifts emulated as (arithmetic shift & mask), multiplies
    # wrap identically to uint32.  Seed is mixed through the full avalanche, so
    # nearby seeds / blocks are decorrelated and every grid step is independent
    # (no stateful PRNG -> the grid axis can be 'parallel').
    h = idx * _i32(0x9E3779B1) + seed
    h = h ^ ((h >> 16) & 0xFFFF)
    h = h * _i32(0x85EBCA6B)
    h = h ^ ((h >> 13) & 0x7FFFF)
    h = h * _i32(0xC2B2AE35)
    h = h ^ ((h >> 16) & 0xFFFF)

    # keep  <=>  (h as uint32) < keep_prob * 2^32   — integer-threshold compare,
    # no uint->float conversion, no extra multiplies.
    keep = (h ^ _i32(0x80000000)) < thresh_ref[...]

    xv = x_ref[...]
    scale = inv_ref[...].astype(xv.dtype)           # native-dtype math (f32 or bf16)
    o_ref[...] = jnp.where(keep, xv * scale, jnp.zeros_like(xv))


@jax.jit
def _grad_dropout_forward(x, keep_prob, seed):
    hidden = x.shape[-1]
    assert keep_prob.shape == (hidden,), (keep_prob.shape, x.shape)
    rows = max(1, x.size // hidden)

    # Per-feature keep probability, clipped exactly like the reference module.
    kp = jnp.clip(keep_prob.astype(jnp.float32), 1e-5, 1.0)
    inv = 1.0 / kp
    # Integer threshold: keep iff rand_u32 < kp * 2^32.  (For kp == 1.0 the
    # threshold saturates at 0xFFFFFFFF: a 2^-32 drop chance, negligible.)
    thr_f = jnp.minimum(kp * jnp.float32(2.0 ** 32), jnp.float32(2.0 ** 32 - 256))
    thr_u = jnp.where(kp >= 1.0, jnp.uint32(0xFFFFFFFF), thr_f.astype(jnp.uint32))
    # Pre-flip the sign bit so the kernel can use a plain signed compare.
    thr_i = lax.bitcast_convert_type(thr_u ^ jnp.uint32(0x80000000), jnp.int32)

    # Lane-dense layout: fold rows into lanes when hidden is small, tiling the
    # per-feature vectors, so stores are full-width (no masked partial stores).
    fold = 128 // math.gcd(hidden, 128)
    if fold > 1 and rows % fold == 0:
        lane, rows2 = hidden * fold, rows // fold
        thr_i, inv = jnp.tile(thr_i, fold), jnp.tile(inv, fold)
    else:
        lane, rows2 = hidden, rows
    x2 = x.reshape(rows2, lane)
    thr2 = thr_i.reshape(1, lane)
    inv2 = inv.reshape(1, lane)

    # Large streaming tiles; no padded copy of the input — a ragged last
    # row-block is handled by the pl.cdiv grid.
    block_rows = max(8, (_TARGET_TILE_ELEMS // lane) // 8 * 8)
    if block_rows >= rows2:
        block_rows = rows2
    grid = (pl.cdiv(rows2, block_rows),)

    seed_arr = jnp.asarray(seed, dtype=jnp.int32).reshape(1)

    out2 = pl.pallas_call(
        functools.partial(_gbd_kernel, lane=lane, block_rows=block_rows),
        out_shape=jax.ShapeDtypeStruct((rows2, lane), x.dtype),
        grid_spec=pltpu.PrefetchScalarGridSpec(
            num_scalar_prefetch=1,
            grid=grid,
            in_specs=[
                pl.BlockSpec((1, lane), lambda i, s: (0, 0)),            # threshold
                pl.BlockSpec((1, lane), lambda i, s: (0, 0)),            # 1/keep_prob
                pl.BlockSpec((block_rows, lane), lambda i, s: (i, 0)),   # x tile
            ],
            out_specs=pl.BlockSpec((block_rows, lane), lambda i, s: (i, 0)),
        ),
        compiler_params=pltpu.CompilerParams(
            # Every grid step is independent (counter-based RNG) -> shard across
            # both TensorCores on v7x; neutral on single-TC v5e/v6e.
            dimension_semantics=("parallel",),
            # Explicit, portable VMEM budget (actual use ~4-5 MiB).
            vmem_limit_bytes=32 * 1024 * 1024,
        ),
    )(seed_arr, thr2, inv2, x2)

    return out2.reshape(x.shape)


class GradBasedDropout:
    """JAX/Pallas port of the reference GradBasedDropout module."""

    def __init__(self, input_dim, drop_prob):
        self.keep_prob = jnp.ones((input_dim,), dtype=jnp.float32)
        self.drop_prob = drop_prob

    def update_keep_prob(self, grad, method):
        g = jnp.abs(grad).sum(axis=-1)
        if method == "TANH":
            kp = jnp.tanh(g)
        elif method == "ABS_NORM":
            kp = (g - jnp.min(g)) / (jnp.max(g) - jnp.min(g) + 1e-7)
        else:
            kp = self.keep_prob
        if self.drop_prob is not None:
            kp = kp * self.drop_prob + (1.0 - self.drop_prob)
        self.keep_prob = kp

    def __call__(self, x, seed=0):
        return _grad_dropout_forward(x, self.keep_prob, seed)


if __name__ == "__main__":
    key = jax.random.PRNGKey(0)
    k1, k2 = jax.random.split(key)

    B, T, D = 4, 8, 32                       # x: (batch, seq, hidden); keep_prob over hidden
    x = jax.random.normal(k1, (B, T, D), dtype=jnp.float32)

    layer = GradBasedDropout(input_dim=D, drop_prob=0.5)
    fake_grad = jax.random.normal(k2, (D, 16), dtype=jnp.float32)
    layer.update_keep_prob(fake_grad, method="ABS_NORM")   # keep_prob in [0.5, 1.0]

    out = layer(x, seed=42)
    out = jax.block_until_ready(out)

    # Sanity checks: shape/dtype preserved; every kept element equals x / keep_prob;
    # kept fraction roughly matches mean(keep_prob).
    assert out.shape == x.shape and out.dtype == x.dtype
    kp = jnp.clip(layer.keep_prob, 1e-5, 1.0)
    expected_kept = x * (1.0 / kp)           # broadcast over the feature axis
    kept = out != 0
    assert jnp.allclose(jnp.where(kept, out, expected_kept), expected_kept,
                        rtol=1e-5, atol=1e-6)
    frac = float(jnp.mean(kept.astype(jnp.float32)))
    mean_kp = float(jnp.mean(kp))
    assert abs(frac - mean_kp) < 0.15, (frac, mean_kp)

    print("KERNEL_OK")
</pallas_src>

<mosaic_0001>
module attributes {stable_mosaic.version = 11 : i64} {
  func.func @_gbd_kernel(%arg0: i32, %arg1: memref<1xi32, #tpu.memory_space<smem>>, %arg2: memref<1x128xi32, #tpu.memory_space<vmem>>, %arg3: memref<1x128xf32, #tpu.memory_space<vmem>>, %arg4: memref<8x128xf32, #tpu.memory_space<vmem>>, %arg5: memref<8x128xf32, #tpu.memory_space<vmem>>) attributes {dimension_semantics = [#tpu.dimension_semantics<parallel>], iteration_bounds = array<i64: 1>, scalar_prefetch = 1 : i64, scratch_operands = 0 : i64, tpu.core_type = #tpu.core_type<tc>, window_params = [{pipeline_mode = #tpu.pipeline_mode<synchronous>, transform_indices = @transform_0, window_bounds = array<i64: 1, 128>}, {pipeline_mode = #tpu.pipeline_mode<synchronous>, transform_indices = @transform_1, window_bounds = array<i64: 1, 128>}, {transform_indices = @transform_2, window_bounds = array<i64: 8, 128>}, {transform_indices = @transform_3, window_bounds = array<i64: 8, 128>}]} {
    %c0 = arith.constant 0 : index
    %0 = memref.load %arg1[%c0] : memref<1xi32, #tpu.memory_space<smem>>
    %c8_i32 = arith.constant 8 : i32
    %1 = arith.muli %arg0, %c8_i32 : i32
    %2 = tpu.iota {dimensions = array<i32: 0>} : vector<8x128xi32>
    %3 = vector.broadcast %1 : i32 to vector<8x128xi32>
    %4 = arith.addi %2, %3 : vector<8x128xi32>
    %5 = tpu.iota {dimensions = array<i32: 1>} : vector<8x128xi32>
    %c128_i32 = arith.constant 128 : i32
    %6 = vector.broadcast %c128_i32 : i32 to vector<8x128xi32>
    %7 = arith.muli %4, %6 : vector<8x128xi32>
    %8 = arith.addi %7, %5 : vector<8x128xi32>
    %c-1640531535_i32 = arith.constant -1640531535 : i32
    %9 = vector.broadcast %c-1640531535_i32 : i32 to vector<8x128xi32>
    %10 = arith.muli %8, %9 : vector<8x128xi32>
    %11 = vector.broadcast %0 : i32 to vector<8x128xi32>
    %12 = arith.addi %10, %11 : vector<8x128xi32>
    %c16_i32 = arith.constant 16 : i32
    %13 = vector.broadcast %c16_i32 : i32 to vector<8x128xi32>
    %14 = arith.shrsi %12, %13 : vector<8x128xi32>
    %c65535_i32 = arith.constant 65535 : i32
    %15 = vector.broadcast %c65535_i32 : i32 to vector<8x128xi32>
    %16 = arith.andi %14, %15 : vector<8x128xi32>
    %17 = arith.xori %12, %16 : vector<8x128xi32>
    %c-2048144789_i32 = arith.constant -2048144789 : i32
    %18 = vector.broadcast %c-2048144789_i32 : i32 to vector<8x128xi32>
    %19 = arith.muli %17, %18 : vector<8x128xi32>
    %c13_i32 = arith.constant 13 : i32
    %20 = vector.broadcast %c13_i32 : i32 to vector<8x128xi32>
    %21 = arith.shrsi %19, %20 : vector<8x128xi32>
    %c524287_i32 = arith.constant 524287 : i32
    %22 = vector.broadcast %c524287_i32 : i32 to vector<8x128xi32>
    %23 = arith.andi %21, %22 : vector<8x128xi32>
    %24 = arith.xori %19, %23 : vector<8x128xi32>
    %c-1028477387_i32 = arith.constant -1028477387 : i32
    %25 = vector.broadcast %c-1028477387_i32 : i32 to vector<8x128xi32>
    %26 = arith.muli %24, %25 : vector<8x128xi32>
    %c16_i32_0 = arith.constant 16 : i32
    %27 = vector.broadcast %c16_i32_0 : i32 to vector<8x128xi32>
    %28 = arith.shrsi %26, %27 : vector<8x128xi32>
    %c65535_i32_1 = arith.constant 65535 : i32
    %29 = vector.broadcast %c65535_i32_1 : i32 to vector<8x128xi32>
    %30 = arith.andi %28, %29 : vector<8x128xi32>
    %31 = arith.xori %26, %30 : vector<8x128xi32>
    %c-2147483648_i32 = arith.constant -2147483648 : i32
    %32 = vector.broadcast %c-2147483648_i32 : i32 to vector<8x128xi32>
    %33 = arith.xori %31, %32 : vector<8x128xi32>
    %c0_2 = arith.constant 0 : index
    %c0_3 = arith.constant 0 : index
    %34 = vector.load %arg2[%c0_2, %c0_3] : memref<1x128xi32, #tpu.memory_space<vmem>>, vector<1x128xi32>
    %35 = vector.broadcast %34 : vector<1x128xi32> to vector<8x128xi32>
    %36 = arith.cmpi slt, %33, %35 : vector<8x128xi32>
    %c0_4 = arith.constant 0 : index
    %c0_5 = arith.constant 0 : index
    %37 = vector.load %arg4[%c0_4, %c0_5] : memref<8x128xf32, #tpu.memory_space<vmem>>, vector<8x128xf32>
    %c0_6 = arith.constant 0 : index
    %c0_7 = arith.constant 0 : index
    %38 = vector.load %arg3[%c0_6, %c0_7] : memref<1x128xf32, #tpu.memory_space<vmem>>, vector<1x128xf32>
    %39 = vector.broadcast %38 : vector<1x128xf32> to vector<8x128xf32>
    %40 = arith.mulf %37, %39 : vector<8x128xf32>
    %cst = arith.constant 0.000000e+00 : f32
    %41 = vector.broadcast %cst : f32 to vector<8x128xf32>
    %42 = arith.select %36, %40, %41 : vector<8x128xi1>, vector<8x128xf32>
    %c0_8 = arith.constant 0 : index
    %c0_9 = arith.constant 0 : index
    %43 = vector.load %arg5[%c0_8, %c0_9] : memref<8x128xf32, #tpu.memory_space<vmem>>, vector<8x128xf32>
    tpu.vector_store %arg5[%c0_8, %c0_9], %42 {strides = array<i32>} : memref<8x128xf32, #tpu.memory_space<vmem>>, vector<8x128xf32>,
    return
  }
  func.func @transform_0(%arg0: i32, %arg1: memref<1xi32, #tpu.memory_space<smem>>) -> (i32, i32) {
    %c0_i32 = arith.constant 0 : i32
    %c0_i32_0 = arith.constant 0 : i32
    %c0_i32_1 = arith.constant 0 : i32
    return %c0_i32, %c0_i32_0 : i32, i32
  }
  func.func @transform_1(%arg0: i32, %arg1: memref<1xi32, #tpu.memory_space<smem>>) -> (i32, i32) {
    %c0_i32 = arith.constant 0 : i32
    %c0_i32_0 = arith.constant 0 : i32
    %c0_i32_1 = arith.constant 0 : i32
    return %c0_i32, %c0_i32_0 : i32, i32
  }
  func.func @transform_2(%arg0: i32, %arg1: memref<1xi32, #tpu.memory_space<smem>>) -> (i32, i32) {
    %c0_i32 = arith.constant 0 : i32
    %c0_i32_0 = arith.constant 0 : i32
    return %arg0, %c0_i32 : i32, i32
  }
  func.func @transform_3(%arg0: i32, %arg1: memref<1xi32, #tpu.memory_space<smem>>) -> (i32, i32) {
    %c0_i32 = arith.constant 0 : i32
    %c0_i32_0 = arith.constant 0 : i32
    return %arg0, %c0_i32 : i32, i32
  }
}

</mosaic_0001>

<llo_original>
// kernel: tile.18
$region0: #{tile.18}
  %s0 = inlined_call_operand.vmem [shape: s32[4,32], index: 0, kind: input, shape index: {}]
  %s1 = inlined_call_operand.vmem [shape: s32[1,128], index: 1, kind: output, shape index: {}]
  $region1: #{tile.18} parent=0
    #allocation0 [shape = 'u8[4096]{0}', space=vmem, size = 0x1000, scoped, tag = 'scoped mem for output reshape']
    #allocation1 [shape = 'u8[4096]{0}', space=vmem, size = 0x1000, scoped, tag = 'scoped mem for input reshape']
    %s3 = sshll.u32 1, 4
    %s4 = ssub.s32 %s3, 1
    %v5 = vld [vmem:[%s0] sm:%s4]
    %6 = vst [vmem:[#allocation1] sm:%s4] %v5
    %v7 = vld [vmem:[#allocation1] sm:$0x1]
    %vm8 = vcmask 261120
    %9 = vst.msk [vmem:[#allocation0] sm:$0x1] %vm8, %v7
    %s10 = scalar_lea.vmem [#allocation1], 3
    %v11 = vld [vmem:[%s10] sm:$0x1]
    %12 = vrot.lane.b32.xlu0 %v11, 96
    %v13 = vpop.permute.xlu0 %12
    %vm14 = vcmask 1048320
    %15 = vst.msk [vmem:[#allocation0] sm:$0x1] %vm14, %v13
    %s16 = scalar_lea.vmem [#allocation1], 2
    %v17 = vld [vmem:[%s16] sm:$0x1]
    %18 = vrot.lane.b32.xlu0 %v17, 64
    %v19 = vpop.permute.xlu0 %18
    %vm20 = vcmask 785920
    %21 = vst.msk [vmem:[#allocation0] sm:$0x1] %vm20, %v19
    %s22 = scalar_lea.vmem [#allocation1], 1
    %v23 = vld [vmem:[%s22] sm:$0x1]
    %24 = vrot.lane.b32.xlu0 %v23, 32
    %v25 = vpop.permute.xlu0 %24
    %vm26 = vcmask 523520
    %27 = vst.msk [vmem:[#allocation0] sm:$0x1] %vm26, %v25
    %s29 = sshll.u32 1, 1
    %s30 = ssub.s32 %s29, 1
    %v32 = vld [vmem:[#allocation0] sm:%s30]
    %s33 = sshll.u32 1, 1
    %s34 = ssub.s32 %s33, 1
    %35 = vst [vmem:[%s1] sm:%s34] %v32

// kernel: tile.13
$region0: #{tile.13}
  #allocation0 [shape = 's32[1]{0}', space=sflag, size = 0x4, scoped, tag = 'scoped memory for tile.13']
  %s0 = inlined_call_operand.vmem [shape: s32[32], index: 0, kind: input, shape index: {}]
  %s1 = inlined_call_operand.vmem [shape: s32[4,32], index: 1, kind: output, shape index: {}]
  // Predicated region
  $region2: #{tile.13} parent=0 // pred_check
    _
  $region3: #{tile.13} parent=0 // pred_check_branch
    %3 = sbr.rel (0) target = $region5
  $region4: #{tile.13} parent=0 // pred_region
    _
  $region5: #{tile.13} parent=0 // pred_fallthru
    _
  %v4 = vld [vmem:[%s0] ss:$0 sm:$0xff]
  %5 = vst [vmem:[%s1] sm:$0xf] %v4

// kernel: tile.17
$region0: #{tile.17}
  #allocation0 [shape = 's32[1]{0}', space=sflag, size = 0x4, scoped, tag = 'scoped memory for tile.17']
  %s0 = inlined_call_operand.vmem [shape: f32[32], index: 0, kind: input, shape index: {}]
  %s1 = inlined_call_operand.vmem [shape: f32[4,32], index: 1, kind: output, shape index: {}]
  // Predicated region
  $region2: #{tile.17} parent=0 // pred_check
    _
  $region3: #{tile.17} parent=0 // pred_check_branch
    %3 = sbr.rel (0) target = $region5
  $region4: #{tile.17} parent=0 // pred_region
    _
  $region5: #{tile.17} parent=0 // pred_fallthru
    _
  %v4 = vld [vmem:[%s0] ss:$0 sm:$0xff]
  %5 = vst [vmem:[%s1] sm:$0xf] %v4

// kernel: tile.19
$region0: #{tile.19}
  %s0 = inlined_call_operand.vmem [shape: f32[4,32], index: 0, kind: input, shape index: {}]
  %s1 = inlined_call_operand.vmem [shape: f32[1,128], index: 1, kind: output, shape index: {}]
  $region1: #{tile.19} parent=0
    #allocation0 [shape = 'u8[4096]{0}', space=vmem, size = 0x1000, scoped, tag = 'scoped mem for output reshape']
    #allocation1 [shape = 'u8[4096]{0}', space=vmem, size = 0x1000, scoped, tag = 'scoped mem for input reshape']
    %s3 = sshll.u32 1, 4
    %s4 = ssub.s32 %s3, 1
    %v5 = vld [vmem:[%s0] sm:%s4]
    %6 = vst [vmem:[#allocation1] sm:%s4] %v5
    %v7 = vld [vmem:[#allocation1] sm:$0x1]
    %vm8 = vcmask 261120
    %9 = vst.msk [vmem:[#allocation0] sm:$0x1] %vm8, %v7
    %s10 = scalar_lea.vmem [#allocation1], 3
    %v11 = vld [vmem:[%s10] sm:$0x1]
    %12 = vrot.lane.b32.xlu0 %v11, 96
    %v13 = vpop.permute.xlu0 %12
    %vm14 = vcmask 1048320
    %15 = vst.msk [vmem:[#allocation0] sm:$0x1] %vm14, %v13
    %s16 = scalar_lea.vmem [#allocation1], 2
    %v17 = vld [vmem:[%s16] sm:$0x1]
    %18 = vrot.lane.b32.xlu0 %v17, 64
    %v19 = vpop.permute.xlu0 %18
    %vm20 = vcmask 785920
    %21 = vst.msk [vmem:[#allocation0] sm:$0x1] %vm20, %v19
    %s22 = scalar_lea.vmem [#allocation1], 1
    %v23 = vld [vmem:[%s22] sm:$0x1]
    %24 = vrot.lane.b32.xlu0 %v23, 32
    %v25 = vpop.permute.xlu0 %24
    %vm26 = vcmask 523520
    %27 = vst.msk [vmem:[#allocation0] sm:$0x1] %vm26, %v25
    %s29 = sshll.u32 1, 1
    %s30 = ssub.s32 %s29, 1
    %v32 = vld [vmem:[#allocation0] sm:%s30]
    %s33 = sshll.u32 1, 1
    %s34 = ssub.s32 %s33, 1
    %35 = vst [vmem:[%s1] sm:%s34] %v32

// kernel: _grad_dropout_forward.1
$region0: #{_grad_dropout_forward.1}
  #allocation0 [shape = 'u32[]', space=smem, size = 0x4, offset = 0x4, fixed_abs, tag = 'smem constant byte address 0x4 - core index']
  #allocation1 [shape = 'u32[144,128]{1,0:T(1,128)}', space=vmem, size = 0x12000, scoped, tag = 'internal scratch']
  #allocation2 [shape = 's32[1]{0}', space=sflag, size = 0x4, scoped, tag = 'scoped memory for _grad_dropout_forward.1']
  #allocation3 [shape = 's32[1]{0:T(128)S(6)}', space=smem, size = 0x200, scoped, tag = 'prefetched SMEM operand 0']
  %s0 = inlined_call_operand.<no memory space> [shape: s32[1], index: 0, kind: input, shape index: {}]
  %s1 = inlined_call_operand.vmem [shape: s32[1,128], index: 1, kind: input, shape index: {}]
  %s2 = inlined_call_operand.vmem [shape: f32[1,128], index: 2, kind: input, shape index: {}]
  %s3 = inlined_call_operand.vmem [shape: f32[8,128], index: 3, kind: input, shape index: {}]
  %s4 = inlined_call_operand.vmem [shape: f32[8,128], index: 4, kind: output, shape index: {}]
  %s5 = sld [smem:[#allocation0]]
  $region22: #{_grad_dropout_forward.1} parent=0
    _
  %s7 = ssub.s32 1, %s5
  %s8 = scalar_select 0, %s7, %s5
  %9 = sst [smem:[#allocation3]] %s0
  // Predicated region
  $region2: #{_grad_dropout_forward.1} parent=0 // pred_check
    _
  $region3: #{_grad_dropout_forward.1} parent=0 // pred_check_branch
    %11 = sbr.rel (0) target = $region5
  $region4: #{_grad_dropout_forward.1} parent=0 // pred_region
    _
  $region5: #{_grad_dropout_forward.1} parent=0 // pred_fallthru
    _
  // Predicated region
  $region6: #{_grad_dropout_forward.1} parent=0 // pred_check
    _
  $region7: #{_grad_dropout_forward.1} parent=0 // pred_check_branch
    %13 = sbr.rel (0) target = $region9
  $region8: #{_grad_dropout_forward.1} parent=0 // pred_region
    _
  $region9: #{_grad_dropout_forward.1} parent=0 // pred_fallthru
    _
  // Predicated region
  $region10: #{_grad_dropout_forward.1} parent=0 // pred_check
    _
  $region11: #{_grad_dropout_forward.1} parent=0 // pred_check_branch
    %15 = sbr.rel (0) target = $region13
  $region12: #{_grad_dropout_forward.1} parent=0 // pred_region
    _
  $region13: #{_grad_dropout_forward.1} parent=0 // pred_fallthru
    _
  %s16 = sld [smem:[#allocation3]]
  %s17 = smul.u32 0, 8
  %v18 = vlaneseq
  %v19 = vshrl.u32 %v18, 7
  %v20 = vstv %s17
  %v21 = vadd.s32 %v19, %v20
  %v22 = vlaneseq
  %v23 = vand.u32 %v22, 127
  %v24 = vmul.u32 %v21, 128
  %v25 = vadd.s32 %v24, %v23
  %v26 = vmul.u32 %v25, 2654435761
  %v27 = vstv %s16
  %v28 = vadd.s32 %v26, %v27
  %v29 = vshra.s32 %v28, 16
  %v30 = vand.u32 %v29, 65535
  %v31 = vxor.u32 %v28, %v30
  %v32 = vmul.u32 %v31, 2246822507
  %v33 = vshra.s32 %v32, 13
  %v34 = vand.u32 %v33, 524287
  %v35 = vxor.u32 %v32, %v34
  %v36 = vmul.u32 %v35, 3266489909
  %v37 = vshra.s32 %v36, 16
  %v38 = vand.u32 %v37, 65535
  %v39 = vxor.u32 %v36, %v38
  %v40 = vxor.u32 %v39, 2147483648
  %v41 = vld [vmem:[%s1] sm:$0x1]
  %v42 = vlaneseq
  %v43 = vshrl.u32 %v42, 7
  %v44 = vsub.s32 0, %v43
  %v45 = vrot.slane %v41, %v44
  %vm46 = vcmp.lt.s32.totalorder %v40, %v45
  %v47 = vld [vmem:[%s3] sm:$0xff]
  %v48 = vld [vmem:[%s2] sm:$0x1]
  %v50 = vlaneseq
  %v51 = vshrl.u32 %v50, 7
  %v52 = vsub.s32 0, %v51
  %v53 = vrot.slane %v48, %v52
  %v55 = vmul.f32 %v47, %v53
  %v56 = vsel %vm46, %v55, 0.0
  %57 = vst [vmem:[%s4] sm:$0xff] %v56
  // Predicated region
  $region14: #{_grad_dropout_forward.1} parent=0 // pred_check
    _
  $region15: #{_grad_dropout_forward.1} parent=0 // pred_check_branch
    %59 = sbr.rel (0) target = $region17
  $region16: #{_grad_dropout_forward.1} parent=0 // pred_region
    _
  $region17: #{_grad_dropout_forward.1} parent=0 // pred_fallthru
    _
  // Predicated region
  $region18: #{_grad_dropout_forward.1} parent=0 // pred_check
    _
  $region19: #{_grad_dropout_forward.1} parent=0 // pred_check_branch
    %61 = sbr.rel (0) target = $region21
  $region20: #{_grad_dropout_forward.1} parent=0 // pred_region
    _
  $region21: #{_grad_dropout_forward.1} parent=0 // pred_fallthru
    _

</llo_original>
